<compile_context>
chip_gen: v7x
topology: tpu7x:2x2x1
jax: 0.10.0
libtpu: 0.0.40
codegen_flags: <defaults>
</compile_context>

<pallas_src>
import math

import jax
import jax.numpy as jnp
from jax.experimental import pallas as pl
from jax.experimental.pallas import tpu as pltpu


def _round_up(n, m):
    return ((n + m - 1) // m) * m


def _vmem_capacity_bytes():
    """Physical VMEM per TensorCore; conservative 64 MiB if query fails."""
    try:
        return int(pltpu.get_tpu_info().vmem_capacity_bytes)
    except Exception:
        return 64 << 20


def _choose_block_b(B, min_grid):
    """Batch tile: multiple of 16, as large as possible, must divide B.

    `min_grid` >= 2 on 2-TensorCore chips so the parallel axis shards.
    """
    cands = (512, 256, 128, 64, 32, 16)
    for c in cands:
        if B % c == 0 and B // c >= min_grid:
            return c
    for c in cands:
        if B % c == 0:
            return c
    return B  # small / irregular batch: single full-array block


def _estimate_vmem_bytes(block_b, tk, H, k_tiles):
    """Padded footprint of all resident buffers (buffer counts as configured)."""
    Bp = _round_up(block_b, 8)
    Kp = _round_up(tk, 128)
    Hp = _round_up(H, 128)
    x_tile = 2 * Bp * Kp * 4                         # f32 x tile, 2 buffers
    w1 = (2 if k_tiles > 1 else 1) * Kp * Hp * 2     # bf16 W1
    w2 = Hp * Hp * 2                                 # bf16 W2, single buffer
    rows = 3 * 8 * Hp * 4                            # b1/b2/w3 rows (padded)
    out = 2 * 8 * max(_round_up(block_b, 128), 128) * 4
    acc = Bp * Hp * 4                                # f32 accumulator scratch
    interm = 3 * Bp * Hp * 4                         # h1/h2 + bf16 temporaries
    return x_tile + w1 + w2 + rows + out + acc + interm


def adv_net_kernel(x_ref, w1_ref, b1_ref, w2_ref, b2_ref, w3_ref, b3_ref,
                   o_ref, acc_ref):
    k = pl.program_id(1)

    @pl.when(k == 0)
    def _init():
        acc_ref[...] = jnp.zeros_like(acc_ref)

    # Layer 1 partial product for this K slice: cast the f32 x tile to bf16
    # on-chip (VPU pack, hidden under the MXU work), accumulate in f32.
    x = x_ref[...].astype(jnp.bfloat16)
    acc_ref[...] += jnp.dot(x, w1_ref[...], preferred_element_type=jnp.float32)

    @pl.when(k == pl.num_programs(1) - 1)
    def _finish():
        # Layer 1 bias + ReLU (dropout1 = identity in eval mode).
        h1 = jnp.maximum(acc_ref[...] + b1_ref[...], 0.0)
        # Layer 2 (dropout2 = identity in eval mode).
        h2 = jnp.dot(h1.astype(jnp.bfloat16), w2_ref[...],
                     preferred_element_type=jnp.float32)
        h2 = jnp.maximum(h2 + b2_ref[...], 0.0)
        # Layer 3 (output width 1): VPU multiply + lane reduction; scalar bias
        # from SMEM.
        w3_row = w3_ref[...].astype(jnp.float32)                     # (1, H)
        y = jnp.sum(h2 * w3_row, axis=-1, keepdims=True) + b3_ref[0]  # (bb, 1)
        # Lane-dense store: transpose to (1, block_b) so the output block is
        # unmasked vst + contiguous writeback.
        o_ref[...] = jax.nn.sigmoid(y.T).astype(o_ref.dtype)


def adversarial_network_forward(x, w1, b1, w2, b2, w3, b3):
    """Fused MLP forward.

    x  : (B, F) f32
    w1 : (F, H), b1 : (1, H) or (H,)
    w2 : (H, H), b2 : (1, H) or (H,)
    w3 : (H, 1), b3 : (1, 1) or (1,)
    returns (B, 1) f32
    """
    B, F = x.shape
    H = w1.shape[1]

    vmem_cap_phys = _vmem_capacity_bytes()
    vmem_cap = int(vmem_cap_phys * 0.85)            # leave compiler headroom
    min_grid_b = 2 if vmem_cap_phys <= (64 << 20) else 1   # 2 TCs on v7x
    block_b = _choose_block_b(B, min_grid_b)

    def pick_tk(bb):
        # Fully resident W1 preferred; otherwise K-tile layer 1 with tk a
        # multiple of 256 (native v6e/v7x MXU width) when possible, else 128.
        if _estimate_vmem_bytes(bb, F, H, 1) <= vmem_cap:
            return F, 1
        for cand in (2048, 1024, 512, 256, 128):
            if F % cand == 0 and _estimate_vmem_bytes(bb, cand, H, F // cand) <= vmem_cap:
                return cand, F // cand
        # TODO(synk): F not divisible by a 128-multiple tile -> keep W1
        #             resident and rely on the compiler/vmem_limit.
        return F, 1

    tk, k_tiles = pick_tk(block_b)
    while (_estimate_vmem_bytes(block_b, tk, H, k_tiles) > vmem_cap
           and block_b > 16 and B % (block_b // 2) == 0):
        block_b //= 2
        tk, k_tiles = pick_tk(block_b)

    est = _estimate_vmem_bytes(block_b, tk, H, k_tiles)
    vmem_limit = min(vmem_cap, max(32 << 20, int(est * 5 // 4)))

    # MXU weight operands in bf16 (f32 accumulation requested in-kernel);
    # x stays f32 and is cast inside the kernel (no un-fused convert pass).
    w1_bf16 = w1.astype(jnp.bfloat16)
    w2_bf16 = w2.astype(jnp.bfloat16)
    w3_row = w3.reshape(1, H).astype(jnp.bfloat16)
    b1f = b1.reshape(1, H).astype(jnp.float32)
    b2f = b2.reshape(1, H).astype(jnp.float32)
    b3s = b3.reshape(1).astype(jnp.float32)          # SMEM scalar

    cost = pl.CostEstimate(
        flops=2 * B * (F * H + H * H + H),
        transcendentals=B,                           # sigmoid
        bytes_accessed=(B * F * 4 + (F * H + H * H + H) * 2
                        + 2 * H * 4 + 4 + B * 4),
    )

    def build(use_buffer_hint):
        def spec(shape, index_map, single_buffer):
            if single_buffer and use_buffer_hint:
                return pl.BlockSpec(shape, index_map,
                                    pipeline_mode=pl.Buffered(1))
            return pl.BlockSpec(shape, index_map)

        in_specs = [
            spec((block_b, tk), lambda i, k: (i, k), False),        # x (f32)
            spec((tk, H), lambda i, k: (k, 0), k_tiles == 1),       # W1
            spec((1, H), lambda i, k: (0, 0), True),                # b1
            spec((H, H), lambda i, k: (0, 0), True),                # W2
            spec((1, H), lambda i, k: (0, 0), True),                # b2
            spec((1, H), lambda i, k: (0, 0), True),                # W3 row
            pl.BlockSpec(memory_space=pltpu.MemorySpace.SMEM),      # b3
        ]
        return pl.pallas_call(
            adv_net_kernel,
            out_shape=jax.ShapeDtypeStruct((B // block_b, block_b), jnp.float32),
            grid_spec=pltpu.PrefetchScalarGridSpec(
                num_scalar_prefetch=0,
                grid=(B // block_b, k_tiles),
                in_specs=in_specs,
                out_specs=pl.BlockSpec((1, block_b), lambda i, k: (i, 0)),
                scratch_shapes=[pltpu.VMEM((block_b, H), jnp.float32)],
            ),
            compiler_params=pltpu.CompilerParams(
                dimension_semantics=("parallel", "arbitrary"),
                vmem_limit_bytes=vmem_limit,
            ),
            cost_estimate=cost,
        )

    args = (x.astype(jnp.float32), w1_bf16, b1f, w2_bf16, b2f, w3_row, b3s)
    try:
        out2d = build(use_buffer_hint=True)(*args)
    except Exception:
        # Fall back to default double-buffering if the single-buffer hint
        # (pipeline_mode=pl.Buffered(1)) is unsupported by this JAX version.
        out2d = build(use_buffer_hint=False)(*args)

    # (B//block_b, block_b) row-major == batch order -> (B, 1).
    return out2d.reshape(B, 1)


def init_linear_params(key, in_features, out_features):
    """Deterministic Kaiming-uniform-style init (shapes match nn.Linear)."""
    kw, kb = jax.random.split(key)
    bound = 1.0 / math.sqrt(in_features)
    # PyTorch stores weight as (out, in); we keep the transposed (in, out)
    # layout for the kernel's x @ W convention.
    w = jax.random.uniform(kw, (in_features, out_features),
                           minval=-bound, maxval=bound, dtype=jnp.float32)
    b = jax.random.uniform(kb, (1, out_features),
                           minval=-bound, maxval=bound, dtype=jnp.float32)
    return w, b


def reference_forward(x, w1, b1, w2, b2, w3, b3):
    h1 = jnp.maximum(x @ w1 + b1, 0.0)
    h2 = jnp.maximum(h1 @ w2 + b2, 0.0)
    return jax.nn.sigmoid(h2 @ w3 + b3)


if __name__ == "__main__":
    # Small shapes consistent with the module: batch=8, in_feature=32, hidden=32.
    B, F, H = 8, 32, 32

    key = jax.random.PRNGKey(0)
    kx, k1, k2, k3 = jax.random.split(key, 4)

    x = jax.random.normal(kx, (B, F), dtype=jnp.float32)
    w1, b1 = init_linear_params(k1, F, H)
    w2, b2 = init_linear_params(k2, H, H)
    w3, b3 = init_linear_params(k3, H, 1)

    y = adversarial_network_forward(x, w1, b1, w2, b2, w3, b3)
    y = jax.block_until_ready(y)

    y_ref = reference_forward(x, w1, b1, w2, b2, w3, b3)
    assert y.shape == (B, 1)
    # bf16 MXU operands with f32 accumulation: compare loosely vs f32 reference.
    err = float(jnp.max(jnp.abs(y - y_ref)))
    assert err < 2e-2, err

    print("KERNEL_OK")
</pallas_src>

<mosaic_0001>
module attributes {stable_mosaic.version = 11 : i64} {
  func.func @adv_net_kernel(%arg0: i32, %arg1: i32, %arg2: memref<8x32xf32, #tpu.memory_space<vmem>>, %arg3: memref<32x32xbf16, #tpu.memory_space<vmem>>, %arg4: memref<1x32xf32, #tpu.memory_space<vmem>>, %arg5: memref<32x32xbf16, #tpu.memory_space<vmem>>, %arg6: memref<1x32xf32, #tpu.memory_space<vmem>>, %arg7: memref<1x32xbf16, #tpu.memory_space<vmem>>, %arg8: memref<1xf32, #tpu.memory_space<smem>>, %arg9: memref<1x8xf32, #tpu.memory_space<vmem>>, %arg10: memref<8x32xf32, #tpu.memory_space<vmem>>) attributes {dimension_semantics = [#tpu.dimension_semantics<parallel>, #tpu.dimension_semantics<arbitrary>], iteration_bounds = array<i64: 1, 1>, scalar_prefetch = 0 : i64, scratch_operands = 1 : i64, tpu.core_type = #tpu.core_type<tc>, window_params = [{transform_indices = @transform_0, window_bounds = array<i64: 8, 32>}, {pipeline_mode = #tpu.pipeline_mode<synchronous>, transform_indices = @transform_1, window_bounds = array<i64: 32, 32>}, {pipeline_mode = #tpu.pipeline_mode<synchronous>, transform_indices = @transform_2, window_bounds = array<i64: 1, 32>}, {pipeline_mode = #tpu.pipeline_mode<synchronous>, transform_indices = @transform_3, window_bounds = array<i64: 32, 32>}, {pipeline_mode = #tpu.pipeline_mode<synchronous>, transform_indices = @transform_4, window_bounds = array<i64: 1, 32>}, {pipeline_mode = #tpu.pipeline_mode<synchronous>, transform_indices = @transform_5, window_bounds = array<i64: 1, 32>}, {transform_indices = @transform_6, window_bounds = array<i64: 1>}, {transform_indices = @transform_7, window_bounds = array<i64: 1, 8>}]} {
    %c0_i32 = arith.constant 0 : i32
    %0 = arith.cmpi eq, %arg1, %c0_i32 : i32
    %1 = arith.extui %0 : i1 to i32
    %c0_i32_0 = arith.constant 0 : i32
    %2 = arith.cmpi ne, %1, %c0_i32_0 : i32
    scf.if %2 {
      %cst_10 = arith.constant 0.000000e+00 : f32
      %13 = vector.broadcast %cst_10 : f32 to vector<8x32xf32>
      %c0_11 = arith.constant 0 : index
      %c0_12 = arith.constant 0 : index
      %14 = vector.load %arg10[%c0_11, %c0_12] : memref<8x32xf32, #tpu.memory_space<vmem>>, vector<8x32xf32>
      tpu.vector_store %arg10[%c0_11, %c0_12], %13 {strides = array<i32>} : memref<8x32xf32, #tpu.memory_space<vmem>>, vector<8x32xf32>,
    } else {
    }
    %c0 = arith.constant 0 : index
    %c0_1 = arith.constant 0 : index
    %3 = vector.load %arg2[%c0, %c0_1] : memref<8x32xf32, #tpu.memory_space<vmem>>, vector<8x32xf32>
    %4 = arith.truncf %3 : vector<8x32xf32> to vector<8x32xbf16>
    %c0_2 = arith.constant 0 : index
    %c0_3 = arith.constant 0 : index
    %5 = vector.load %arg10[%c0_2, %c0_3] : memref<8x32xf32, #tpu.memory_space<vmem>>, vector<8x32xf32>
    %c0_4 = arith.constant 0 : index
    %c0_5 = arith.constant 0 : index
    %6 = vector.load %arg3[%c0_4, %c0_5] : memref<32x32xbf16, #tpu.memory_space<vmem>>, vector<32x32xbf16>
    %cst = arith.constant dense<0.000000e+00> : vector<8x32xf32>
    %7 = tpu.matmul %4, %6, %cst {dimension_numbers = #tpu.dot_dimension_numbers<[1], [0], [0], [1], [0, 0, 1, 1], [], []>} : vector<8x32xbf16>, vector<32x32xbf16>, vector<8x32xf32> -> vector<8x32xf32>
    %8 = arith.addf %5, %7 : vector<8x32xf32>
    %c0_6 = arith.constant 0 : index
    %c0_7 = arith.constant 0 : index
    %9 = vector.load %arg10[%c0_6, %c0_7] : memref<8x32xf32, #tpu.memory_space<vmem>>, vector<8x32xf32>
    tpu.vector_store %arg10[%c0_6, %c0_7], %8 {strides = array<i32>} : memref<8x32xf32, #tpu.memory_space<vmem>>, vector<8x32xf32>,
    %c0_i32_8 = arith.constant 0 : i32
    %10 = arith.cmpi eq, %arg1, %c0_i32_8 : i32
    %11 = arith.extui %10 : i1 to i32
    %c0_i32_9 = arith.constant 0 : i32
    %12 = arith.cmpi ne, %11, %c0_i32_9 : i32
    scf.if %12 {
      %c0_10 = arith.constant 0 : index
      %c0_11 = arith.constant 0 : index
      %13 = vector.load %arg10[%c0_10, %c0_11] : memref<8x32xf32, #tpu.memory_space<vmem>>, vector<8x32xf32>
      %c0_12 = arith.constant 0 : index
      %c0_13 = arith.constant 0 : index
      %14 = vector.load %arg4[%c0_12, %c0_13] : memref<1x32xf32, #tpu.memory_space<vmem>>, vector<1x32xf32>
      %15 = vector.broadcast %14 : vector<1x32xf32> to vector<8x32xf32>
      %16 = arith.addf %13, %15 : vector<8x32xf32>
      %cst_14 = arith.constant 0.000000e+00 : f32
      %17 = vector.broadcast %cst_14 : f32 to vector<8x32xf32>
      %18 = arith.maximumf %16, %17 : vector<8x32xf32>
      %19 = arith.truncf %18 : vector<8x32xf32> to vector<8x32xbf16>
      %c0_15 = arith.constant 0 : index
      %c0_16 = arith.constant 0 : index
      %20 = vector.load %arg5[%c0_15, %c0_16] : memref<32x32xbf16, #tpu.memory_space<vmem>>, vector<32x32xbf16>
      %cst_17 = arith.constant dense<0.000000e+00> : vector<8x32xf32>
      %21 = tpu.matmul %19, %20, %cst_17 {dimension_numbers = #tpu.dot_dimension_numbers<[1], [0], [0], [1], [0, 0, 1, 1], [], []>} : vector<8x32xbf16>, vector<32x32xbf16>, vector<8x32xf32> -> vector<8x32xf32>
      %c0_18 = arith.constant 0 : index
      %c0_19 = arith.constant 0 : index
      %22 = vector.load %arg6[%c0_18, %c0_19] : memref<1x32xf32, #tpu.memory_space<vmem>>, vector<1x32xf32>
      %23 = vector.broadcast %22 : vector<1x32xf32> to vector<8x32xf32>
      %24 = arith.addf %21, %23 : vector<8x32xf32>
      %cst_20 = arith.constant 0.000000e+00 : f32
      %25 = vector.broadcast %cst_20 : f32 to vector<8x32xf32>
      %26 = arith.maximumf %24, %25 : vector<8x32xf32>
      %c0_21 = arith.constant 0 : index
      %c0_22 = arith.constant 0 : index
      %27 = vector.load %arg7[%c0_21, %c0_22] : memref<1x32xbf16, #tpu.memory_space<vmem>>, vector<1x32xbf16>
      %28 = arith.extf %27 : vector<1x32xbf16> to vector<1x32xf32>
      %29 = vector.broadcast %28 : vector<1x32xf32> to vector<8x32xf32>
      %30 = arith.mulf %26, %29 : vector<8x32xf32>
      %cst_23 = arith.constant dense<0.000000e+00> : vector<8xf32>
      %31 = vector.multi_reduction <add>, %30, %cst_23 [1] : vector<8x32xf32> to vector<8xf32>
      %32 = vector.shape_cast %31 : vector<8xf32> to vector<8x1xf32>
      %c0_24 = arith.constant 0 : index
      %33 = memref.load %arg8[%c0_24] : memref<1xf32, #tpu.memory_space<smem>>
      %34 = vector.broadcast %33 : f32 to vector<8x1xf32>
      %35 = arith.addf %32, %34 : vector<8x1xf32>
      %36 = tpu.transpose %35, [1, 0] : vector<8x1xf32> -> vector<1x8xf32>
      %37 = arith.negf %36 : vector<1x8xf32>
      %38 = math.exp %37 : vector<1x8xf32>
      %cst_25 = arith.constant 1.000000e+00 : f32
      %39 = vector.broadcast %cst_25 : f32 to vector<1x8xf32>
      %40 = arith.addf %39, %38 : vector<1x8xf32>
      %41 = arith.divf %39, %40 : vector<1x8xf32>
      %c0_26 = arith.constant 0 : index
      %c0_27 = arith.constant 0 : index
      %42 = vector.load %arg9[%c0_26, %c0_27] : memref<1x8xf32, #tpu.memory_space<vmem>>, vector<1x8xf32>
      tpu.vector_store %arg9[%c0_26, %c0_27], %41 {strides = array<i32>} : memref<1x8xf32, #tpu.memory_space<vmem>>, vector<1x8xf32>,
    } else {
    }
    return
  }
  func.func @transform_0(%arg0: i32, %arg1: i32) -> (i32, i32) {
    %c0_i32 = arith.constant 0 : i32
    return %arg0, %arg1 : i32, i32
  }
  func.func @transform_1(%arg0: i32, %arg1: i32) -> (i32, i32) {
    %c0_i32 = arith.constant 0 : i32
    %c0_i32_0 = arith.constant 0 : i32
    return %arg1, %c0_i32 : i32, i32
  }
  func.func @transform_2(%arg0: i32, %arg1: i32) -> (i32, i32) {
    %c0_i32 = arith.constant 0 : i32
    %c0_i32_0 = arith.constant 0 : i32
    %c0_i32_1 = arith.constant 0 : i32
    return %c0_i32, %c0_i32_0 : i32, i32
  }
  func.func @transform_3(%arg0: i32, %arg1: i32) -> (i32, i32) {
    %c0_i32 = arith.constant 0 : i32
    %c0_i32_0 = arith.constant 0 : i32
    %c0_i32_1 = arith.constant 0 : i32
    return %c0_i32, %c0_i32_0 : i32, i32
  }
  func.func @transform_4(%arg0: i32, %arg1: i32) -> (i32, i32) {
    %c0_i32 = arith.constant 0 : i32
    %c0_i32_0 = arith.constant 0 : i32
    %c0_i32_1 = arith.constant 0 : i32
    return %c0_i32, %c0_i32_0 : i32, i32
  }
  func.func @transform_5(%arg0: i32, %arg1: i32) -> (i32, i32) {
    %c0_i32 = arith.constant 0 : i32
    %c0_i32_0 = arith.constant 0 : i32
    %c0_i32_1 = arith.constant 0 : i32
    return %c0_i32, %c0_i32_0 : i32, i32
  }
  func.func @transform_6(%arg0: i32, %arg1: i32) -> i32 {
    %c0_i32 = arith.constant 0 : i32
    %c0_i32_0 = arith.constant 0 : i32
    return %c0_i32 : i32
  }
  func.func @transform_7(%arg0: i32, %arg1: i32) -> (i32, i32) {
    %c0_i32 = arith.constant 0 : i32
    %c0_i32_0 = arith.constant 0 : i32
    return %arg0, %c0_i32 : i32, i32
  }
}

module attributes {stable_mosaic.version = 11 : i64} {
  func.func @adv_net_kernel(%arg0: i32, %arg1: i32, %arg2: memref<8x32xf32, #tpu.memory_space<vmem>>, %arg3: memref<32x32xbf16, #tpu.memory_space<vmem>>, %arg4: memref<1x32xf32, #tpu.memory_space<vmem>>, %arg5: memref<32x32xbf16, #tpu.memory_space<vmem>>, %arg6: memref<1x32xf32, #tpu.memory_space<vmem>>, %arg7: memref<1x32xbf16, #tpu.memory_space<vmem>>, %arg8: memref<1xf32, #tpu.memory_space<smem>>, %arg9: memref<1x8xf32, #tpu.memory_space<vmem>>, %arg10: memref<8x32xf32, #tpu.memory_space<vmem>>) attributes {dimension_semantics = [#tpu.dimension_semantics<parallel>, #tpu.dimension_semantics<arbitrary>], iteration_bounds = array<i64: 1, 1>, scalar_prefetch = 0 : i64, scratch_operands = 1 : i64, tpu.core_type = #tpu.core_type<tc>, window_params = [{transform_indices = @transform_0, window_bounds = array<i64: 8, 32>}, {transform_indices = @transform_1, window_bounds = array<i64: 32, 32>}, {pipeline_mode = #tpu.pipeline_mode<synchronous>, transform_indices = @transform_2, window_bounds = array<i64: 1, 32>}, {pipeline_mode = #tpu.pipeline_mode<synchronous>, transform_indices = @transform_3, window_bounds = array<i64: 32, 32>}, {pipeline_mode = #tpu.pipeline_mode<synchronous>, transform_indices = @transform_4, window_bounds = array<i64: 1, 32>}, {pipeline_mode = #tpu.pipeline_mode<synchronous>, transform_indices = @transform_5, window_bounds = array<i64: 1, 32>}, {transform_indices = @transform_6, window_bounds = array<i64: 1>}, {transform_indices = @transform_7, window_bounds = array<i64: 1, 8>}]} {
    %c0_i32 = arith.constant 0 : i32
    %0 = arith.cmpi eq, %arg1, %c0_i32 : i32
    %1 = arith.extui %0 : i1 to i32
    %c0_i32_0 = arith.constant 0 : i32
    %2 = arith.cmpi ne, %1, %c0_i32_0 : i32
    scf.if %2 {
      %cst_10 = arith.constant 0.000000e+00 : f32
      %13 = vector.broadcast %cst_10 : f32 to vector<8x32xf32>
      %c0_11 = arith.constant 0 : index
      %c0_12 = arith.constant 0 : index
      %14 = vector.load %arg10[%c0_11, %c0_12] : memref<8x32xf32, #tpu.memory_space<vmem>>, vector<8x32xf32>
      tpu.vector_store %arg10[%c0_11, %c0_12], %13 {strides = array<i32>} : memref<8x32xf32, #tpu.memory_space<vmem>>, vector<8x32xf32>,
    } else {
    }
    %c0 = arith.constant 0 : index
    %c0_1 = arith.constant 0 : index
    %3 = vector.load %arg2[%c0, %c0_1] : memref<8x32xf32, #tpu.memory_space<vmem>>, vector<8x32xf32>
    %4 = arith.truncf %3 : vector<8x32xf32> to vector<8x32xbf16>
    %c0_2 = arith.constant 0 : index
    %c0_3 = arith.constant 0 : index
    %5 = vector.load %arg10[%c0_2, %c0_3] : memref<8x32xf32, #tpu.memory_space<vmem>>, vector<8x32xf32>
    %c0_4 = arith.constant 0 : index
    %c0_5 = arith.constant 0 : index
    %6 = vector.load %arg3[%c0_4, %c0_5] : memref<32x32xbf16, #tpu.memory_space<vmem>>, vector<32x32xbf16>
    %cst = arith.constant dense<0.000000e+00> : vector<8x32xf32>
    %7 = tpu.matmul %4, %6, %cst {dimension_numbers = #tpu.dot_dimension_numbers<[1], [0], [0], [1], [0, 0, 1, 1], [], []>} : vector<8x32xbf16>, vector<32x32xbf16>, vector<8x32xf32> -> vector<8x32xf32>
    %8 = arith.addf %5, %7 : vector<8x32xf32>
    %c0_6 = arith.constant 0 : index
    %c0_7 = arith.constant 0 : index
    %9 = vector.load %arg10[%c0_6, %c0_7] : memref<8x32xf32, #tpu.memory_space<vmem>>, vector<8x32xf32>
    tpu.vector_store %arg10[%c0_6, %c0_7], %8 {strides = array<i32>} : memref<8x32xf32, #tpu.memory_space<vmem>>, vector<8x32xf32>,
    %c0_i32_8 = arith.constant 0 : i32
    %10 = arith.cmpi eq, %arg1, %c0_i32_8 : i32
    %11 = arith.extui %10 : i1 to i32
    %c0_i32_9 = arith.constant 0 : i32
    %12 = arith.cmpi ne, %11, %c0_i32_9 : i32
    scf.if %12 {
      %c0_10 = arith.constant 0 : index
      %c0_11 = arith.constant 0 : index
      %13 = vector.load %arg10[%c0_10, %c0_11] : memref<8x32xf32, #tpu.memory_space<vmem>>, vector<8x32xf32>
      %c0_12 = arith.constant 0 : index
      %c0_13 = arith.constant 0 : index
      %14 = vector.load %arg4[%c0_12, %c0_13] : memref<1x32xf32, #tpu.memory_space<vmem>>, vector<1x32xf32>
      %15 = vector.broadcast %14 : vector<1x32xf32> to vector<8x32xf32>
      %16 = arith.addf %13, %15 : vector<8x32xf32>
      %cst_14 = arith.constant 0.000000e+00 : f32
      %17 = vector.broadcast %cst_14 : f32 to vector<8x32xf32>
      %18 = arith.maximumf %16, %17 : vector<8x32xf32>
      %19 = arith.truncf %18 : vector<8x32xf32> to vector<8x32xbf16>
      %c0_15 = arith.constant 0 : index
      %c0_16 = arith.constant 0 : index
      %20 = vector.load %arg5[%c0_15, %c0_16] : memref<32x32xbf16, #tpu.memory_space<vmem>>, vector<32x32xbf16>
      %cst_17 = arith.constant dense<0.000000e+00> : vector<8x32xf32>
      %21 = tpu.matmul %19, %20, %cst_17 {dimension_numbers = #tpu.dot_dimension_numbers<[1], [0], [0], [1], [0, 0, 1, 1], [], []>} : vector<8x32xbf16>, vector<32x32xbf16>, vector<8x32xf32> -> vector<8x32xf32>
      %c0_18 = arith.constant 0 : index
      %c0_19 = arith.constant 0 : index
      %22 = vector.load %arg6[%c0_18, %c0_19] : memref<1x32xf32, #tpu.memory_space<vmem>>, vector<1x32xf32>
      %23 = vector.broadcast %22 : vector<1x32xf32> to vector<8x32xf32>
      %24 = arith.addf %21, %23 : vector<8x32xf32>
      %cst_20 = arith.constant 0.000000e+00 : f32
      %25 = vector.broadcast %cst_20 : f32 to vector<8x32xf32>
      %26 = arith.maximumf %24, %25 : vector<8x32xf32>
      %c0_21 = arith.constant 0 : index
      %c0_22 = arith.constant 0 : index
      %27 = vector.load %arg7[%c0_21, %c0_22] : memref<1x32xbf16, #tpu.memory_space<vmem>>, vector<1x32xbf16>
      %28 = arith.extf %27 : vector<1x32xbf16> to vector<1x32xf32>
      %29 = vector.broadcast %28 : vector<1x32xf32> to vector<8x32xf32>
      %30 = arith.mulf %26, %29 : vector<8x32xf32>
      %cst_23 = arith.constant dense<0.000000e+00> : vector<8xf32>
      %31 = vector.multi_reduction <add>, %30, %cst_23 [1] : vector<8x32xf32> to vector<8xf32>
      %32 = vector.shape_cast %31 : vector<8xf32> to vector<8x1xf32>
      %c0_24 = arith.constant 0 : index
      %33 = memref.load %arg8[%c0_24] : memref<1xf32, #tpu.memory_space<smem>>
      %34 = vector.broadcast %33 : f32 to vector<8x1xf32>
      %35 = arith.addf %32, %34 : vector<8x1xf32>
      %36 = tpu.transpose %35, [1, 0] : vector<8x1xf32> -> vector<1x8xf32>
      %37 = arith.negf %36 : vector<1x8xf32>
      %38 = math.exp %37 : vector<1x8xf32>
      %cst_25 = arith.constant 1.000000e+00 : f32
      %39 = vector.broadcast %cst_25 : f32 to vector<1x8xf32>
      %40 = arith.addf %39, %38 : vector<1x8xf32>
      %41 = arith.divf %39, %40 : vector<1x8xf32>
      %c0_26 = arith.constant 0 : index
      %c0_27 = arith.constant 0 : index
      %42 = vector.load %arg9[%c0_26, %c0_27] : memref<1x8xf32, #tpu.memory_space<vmem>>, vector<1x8xf32>
      tpu.vector_store %arg9[%c0_26, %c0_27], %41 {strides = array<i32>} : memref<1x8xf32, #tpu.memory_space<vmem>>, vector<1x8xf32>,
    } else {
    }
    return
  }
  func.func @transform_0(%arg0: i32, %arg1: i32) -> (i32, i32) {
    %c0_i32 = arith.constant 0 : i32
    return %arg0, %arg1 : i32, i32
  }
  func.func @transform_1(%arg0: i32, %arg1: i32) -> (i32, i32) {
    %c0_i32 = arith.constant 0 : i32
    %c0_i32_0 = arith.constant 0 : i32
    return %arg1, %c0_i32 : i32, i32
  }
  func.func @transform_2(%arg0: i32, %arg1: i32) -> (i32, i32) {
    %c0_i32 = arith.constant 0 : i32
    %c0_i32_0 = arith.constant 0 : i32
    %c0_i32_1 = arith.constant 0 : i32
    return %c0_i32, %c0_i32_0 : i32, i32
  }
  func.func @transform_3(%arg0: i32, %arg1: i32) -> (i32, i32) {
    %c0_i32 = arith.constant 0 : i32
    %c0_i32_0 = arith.constant 0 : i32
    %c0_i32_1 = arith.constant 0 : i32
    return %c0_i32, %c0_i32_0 : i32, i32
  }
  func.func @transform_4(%arg0: i32, %arg1: i32) -> (i32, i32) {
    %c0_i32 = arith.constant 0 : i32
    %c0_i32_0 = arith.constant 0 : i32
    %c0_i32_1 = arith.constant 0 : i32
    return %c0_i32, %c0_i32_0 : i32, i32
  }
  func.func @transform_5(%arg0: i32, %arg1: i32) -> (i32, i32) {
    %c0_i32 = arith.constant 0 : i32
    %c0_i32_0 = arith.constant 0 : i32
    %c0_i32_1 = arith.constant 0 : i32
    return %c0_i32, %c0_i32_0 : i32, i32
  }
  func.func @transform_6(%arg0: i32, %arg1: i32) -> i32 {
    %c0_i32 = arith.constant 0 : i32
    %c0_i32_0 = arith.constant 0 : i32
    return %c0_i32 : i32
  }
  func.func @transform_7(%arg0: i32, %arg1: i32) -> (i32, i32) {
    %c0_i32 = arith.constant 0 : i32
    %c0_i32_0 = arith.constant 0 : i32
    return %arg0, %c0_i32 : i32, i32
  }
}

</mosaic_0001>

<llo_original>
// kernel: tpu_custom_call.1
$region0: #{tpu_custom_call.1}
  #allocation0 [shape = 'u32[]', space=smem, size = 0x4, offset = 0x4, fixed_abs, tag = 'smem constant byte address 0x4 - core index']
  #allocation1 [shape = 'u32[144,128]{1,0:T(1,128)}', space=vmem, size = 0x12000, scoped, tag = 'internal scratch']
  #allocation2 [shape = 'f32[8,32]{1,0:T(8,128)}', space=vmem, size = 0x1000, scoped, tag = 'scratch operand']
  #allocation3 [shape = 'f32[1]{0:T(128)S(6)}', space=smem, size = 0x200, scoped, tag = 'scoped memory for tpu_custom_call.1']
  %s0 = inlined_call_operand.hbm [shape: f32[8,32], index: 0, kind: input, shape index: {}]
  %s1 = inlined_call_operand.hbm [shape: bf16[32,32], index: 1, kind: input, shape index: {}]
  %s2 = inlined_call_operand.vmem [shape: f32[1,32], index: 2, kind: input, shape index: {}]
  %s3 = inlined_call_operand.hbm [shape: bf16[32,32], index: 3, kind: input, shape index: {}]
  %s4 = inlined_call_operand.vmem [shape: f32[1,32], index: 4, kind: input, shape index: {}]
  %s5 = inlined_call_operand.vmem [shape: bf16[1,32], index: 5, kind: input, shape index: {}]
  %s6 = inlined_call_operand.<no memory space> [shape: f32[1], index: 6, kind: input, shape index: {}]
  %s7 = inlined_call_operand.hbm [shape: f32[1,8], index: 7, kind: output, shape index: {}]
  %s8 = sld [smem:[#allocation0]]
  $region58: #{tpu_custom_call.1} parent=0
    _
  %s10 = ssub.s32 1, %s8
  %s11 = scalar_select 0, %s10, %s8
  %12 = sst [smem:[#allocation3]] %s6
  $region1: #{tpu_custom_call.1} parent=0
    #allocation4 [shape = 'u8[4096]{0}', space=vmem, size = 0x1000, scoped, tag = 'input window, operand 0, single buffered']
    #allocation5 [shape = 's32[1]{0}', space=sflag, size = 0x4, scoped, tag = 'scoped memory for tpu_custom_call.1']
    #allocation6 [shape = 's32[1]{0}', space=sflag, size = 0x4, scoped, tag = 'scoped memory for tpu_custom_call.1']
    #allocation7 [shape = 'u8[8192]{0}', space=vmem, size = 0x2000, scoped, tag = 'input window, operand 1, single buffered']
    #allocation8 [shape = 's32[1]{0}', space=sflag, size = 0x4, scoped, tag = 'scoped memory for tpu_custom_call.1']
    #allocation9 [shape = 'u8[8192]{0}', space=vmem, size = 0x2000, scoped, tag = 'input window, operand 3, single buffered']
    #allocation10 [shape = 'u8[512]{0}', space=vmem, size = 0x400, scoped, tag = 'output window, operand 0, single buffered']
    %13 = vsyncpa [#allocation5], 0
    %14 = vsyncpa [#allocation8], 0
    %15 = vsyncpa [#allocation6], 0
    // Predicated region
    $region2: #{tpu_custom_call.1} parent=1 // pred_check
      _
    $region3: #{tpu_custom_call.1} parent=1 // pred_check_branch
      %17 = sbr.rel (0) target = $region5
    $region4: #{tpu_custom_call.1} parent=1 // pred_region
      %s19 = ssub.s32 128, 128
      %20 = vsyncadd [#allocation5], %s19
      %s22 = sshll.u32 [#allocation4], 4
      %s23 = int_to_ptr.vmem [resolvable:$true] %s22
      %25 = dma.hbm_to_vmem [thread:$0]  %s0, 128, %s23, [#allocation5]
    $region5: #{tpu_custom_call.1} parent=1 // pred_fallthru
      _
    // Predicated region
    $region6: #{tpu_custom_call.1} parent=1 // pred_check
      _
    $region7: #{tpu_custom_call.1} parent=1 // pred_check_branch
      %27 = sbr.rel (0) target = $region9
    $region8: #{tpu_custom_call.1} parent=1 // pred_region
      %s29 = ssub.s32 256, 256
      %30 = vsyncadd [#allocation8], %s29
      %s31 = sshll.u32 [#allocation7], 4
      %s32 = int_to_ptr.vmem [resolvable:$true] %s31
      %37 = dma.hbm_to_vmem [thread:$0]  %s1, 256, %s32, [#allocation8], 64, 64, 4
    $region9: #{tpu_custom_call.1} parent=1 // pred_fallthru
      _
    // Predicated region
    $region10: #{tpu_custom_call.1} parent=1 // pred_check
      _
    $region11: #{tpu_custom_call.1} parent=1 // pred_check_branch
      %39 = sbr.rel (0) target = $region13
    $region12: #{tpu_custom_call.1} parent=1 // pred_region
      _
    $region13: #{tpu_custom_call.1} parent=1 // pred_fallthru
      _
    // Predicated region
    $region14: #{tpu_custom_call.1} parent=1 // pred_check
      _
    $region15: #{tpu_custom_call.1} parent=1 // pred_check_branch
      %41 = sbr.rel (0) target = $region17
    $region16: #{tpu_custom_call.1} parent=1 // pred_region
      %s43 = ssub.s32 256, 256
      %44 = vsyncadd [#allocation8], %s43
      %s45 = sshll.u32 [#allocation9], 4
      %s46 = int_to_ptr.vmem [resolvable:$true] %s45
      %51 = dma.hbm_to_vmem [thread:$0]  %s3, 256, %s46, [#allocation8], 64, 64, 4
    $region17: #{tpu_custom_call.1} parent=1 // pred_fallthru
      _
    // Predicated region
    $region18: #{tpu_custom_call.1} parent=1 // pred_check
      _
    $region19: #{tpu_custom_call.1} parent=1 // pred_check_branch
      %53 = sbr.rel (0) target = $region21
    $region20: #{tpu_custom_call.1} parent=1 // pred_region
      _
    $region21: #{tpu_custom_call.1} parent=1 // pred_fallthru
      _
    // Predicated region
    $region22: #{tpu_custom_call.1} parent=1 // pred_check
      _
    $region23: #{tpu_custom_call.1} parent=1 // pred_check_branch
      %55 = sbr.rel (0) target = $region25
    $region24: #{tpu_custom_call.1} parent=1 // pred_region
      _
    $region25: #{tpu_custom_call.1} parent=1 // pred_fallthru
      _
    // Predicated region
    $region26: #{tpu_custom_call.1} parent=1 // pred_check
      _
    $region27: #{tpu_custom_call.1} parent=1 // pred_check_branch
      %57 = sbr.rel (0) target = $region29
    $region28: #{tpu_custom_call.1} parent=1 // pred_region
      _
    $region29: #{tpu_custom_call.1} parent=1 // pred_fallthru
      _
    // Predicated region
    $region30: #{tpu_custom_call.1} parent=1 // pred_check
      _
    $region31: #{tpu_custom_call.1} parent=1 // pred_check_branch
      %59 = sbr.rel (0) target = $region33
    $region32: #{tpu_custom_call.1} parent=1 // pred_region
      %60 = dma.done [#allocation5], 128
    $region33: #{tpu_custom_call.1} parent=1 // pred_fallthru
      _
    // Predicated region
    $region34: #{tpu_custom_call.1} parent=1 // pred_check
      _
    $region35: #{tpu_custom_call.1} parent=1 // pred_check_branch
      %62 = sbr.rel (0) target = $region37
    $region36: #{tpu_custom_call.1} parent=1 // pred_region
      %63 = dma.done [#allocation8], 256
    $region37: #{tpu_custom_call.1} parent=1 // pred_fallthru
      _
    // Predicated region
    $region38: #{tpu_custom_call.1} parent=1 // pred_check
      _
    $region39: #{tpu_custom_call.1} parent=1 // pred_check_branch
      %65 = sbr.rel (0) target = $region41
    $region40: #{tpu_custom_call.1} parent=1 // pred_region
      %66 = dma.done [#allocation8], 256
    $region41: #{tpu_custom_call.1} parent=1 // pred_fallthru
      _
    %p68 = scmp.eq.s32.totalorder 0, 0
    // Predicated region
    $region42: #{tpu_custom_call.1} parent=1 // pred_check
      %p69 = pneg %p68
    $region43: #{tpu_custom_call.1} parent=1 // pred_check_branch
      %71 = sbr.rel (%p69) target = $region45
    $region44: #{tpu_custom_call.1} parent=1 // pred_region
      %vm72 = vcmask 261120
      %73 = vst.msk [vmem:[#allocation2] sm:$0xff] %vm72, 0.0
    $region45: #{tpu_custom_call.1} parent=1 // pred_fallthru
      _
    %v74 = vld [vmem:[#allocation4] sm:$0xff]
    %v75 = vpack.c.bf16 %v74, %v74
    %v76 = vld [vmem:[#allocation2] sm:$0xff]
    %v77 = vld [vmem:[#allocation7] sm:$0xf]
    %v78 = vld [vmem:[#allocation7 + $0x4] sm:$0xf]
    %v79 = vld [vmem:[#allocation7 + $0x8] sm:$0xf]
    %v80 = vld [vmem:[#allocation7 + $0xc] sm:$0xf]
    %v85 = vunpack.c.l.b16 %v77
    %v86 = vunpack.c.l.b16 %v78
    %v87 = vunpack.c.l.b16 %v79
    %v88 = vunpack.c.l.b16 %v80
    %v89 = vpack.c.b16 %v86, %v85
    %v90 = vpack.c.b16 %v88, %v87
    %vm93 = vcmask 261120
    %v95 = vsel %vm93, %v75, 0
    %97 = vmatprep.subr.bf16.mxu0 0
    %98 = vmatpush1.bf16.msra.mxu0 %v89
    %99 = vmatprep.subr.bf16.mxu0 0
    %100 = vmatpush1.bf16.msra.mxu0 %v90
    %101 = vmatprep.subr.bf16.mxu0 0
    %102 = vmatpush1.bf16.msra.mxu0 0
    %103 = vmatprep.subr.bf16.mxu0 0
    %104 = vmatpush1.bf16.msra.mxu0 0
    %105 = vmatprep.subr.bf16.mxu0 0
    %106 = vmatpush1.bf16.msra.mxu0 0
    %107 = vmatprep.subr.bf16.mxu0 0
    %108 = vmatpush1.bf16.msra.mxu0 0
    %109 = vmatprep.subr.bf16.mxu0 0
    %110 = vmatpush1.bf16.msra.mxu0 0
    %111 = vmatprep.subr.bf16.mxu0 0
    %112 = vmatpush1.bf16.msra.mxu0 0
    %113 = vmatprep.subr.bf16.mxu0 0
    %114 = vmatpush1.bf16.msra.mxu0 0
    %115 = vmatprep.subr.bf16.mxu0 0
    %116 = vmatpush1.bf16.msra.mxu0 0
    %117 = vmatprep.subr.bf16.mxu0 0
    %118 = vmatpush1.bf16.msra.mxu0 0
    %119 = vmatprep.subr.bf16.mxu0 0
    %120 = vmatpush1.bf16.msra.mxu0 0
    %121 = vmatprep.subr.bf16.mxu0 0
    %122 = vmatpush1.bf16.msra.mxu0 0
    %123 = vmatprep.subr.bf16.mxu0 0
    %124 = vmatpush1.bf16.msra.mxu0 0
    %125 = vmatprep.subr.bf16.mxu0 0
    %126 = vmatpush1.bf16.msra.mxu0 0
    %127 = vmatprep.subr.bf16.mxu0 0
    %128 = vmatpush1.bf16.msra.mxu0 0
    %129 = vmatprep.mubr.bf16.mxu0 0
    %130 = vmatmul.mubr.bf16.gmra.mrb[0].mxu0 %v95
    %v131 = vpop.f32.mrb[0].mxu0
    %v132 = vadd.f32 0.0, %v131
    %v133 = vpop.f32.mrb[0].mxu0
    %v134 = vpop.f32.mrb[0].mxu0
    %v135 = vpop.f32.mrb[0].mxu0
    %136 = vdwg.mxu0
    %v137 = vadd.f32 %v76, %v132
    %138 = vst.msk [vmem:[#allocation2] sm:$0xff] %vm93, %v137
    // Predicated region
    $region46: #{tpu_custom_call.1} parent=1 // pred_check
      %p139 = pneg %p68
    $region47: #{tpu_custom_call.1} parent=1 // pred_check_branch
      %141 = sbr.rel (%p139) target = $region49
    $region48: #{tpu_custom_call.1} parent=1 // pred_region
      %v142 = vld [vmem:[#allocation2] sm:$0xff]
      %v143 = vld [vmem:[%s2] sm:$0x1]
      %v145 = vlaneseq
      %v146 = vshrl.u32 %v145, 7
      %v147 = vsub.s32 0, %v146
      %v148 = vrot.slane %v143, %v147
      %v150 = vadd.f32 %v142, %v148
      %v151 = vmax.f32 %v150, 0.0
      %v152 = vpack.c.bf16 %v151, %v151
      %v153 = vld [vmem:[#allocation9] sm:$0xf]
      %v154 = vld [vmem:[#allocation9 + $0x4] sm:$0xf]
      %v155 = vld [vmem:[#allocation9 + $0x8] sm:$0xf]
      %v156 = vld [vmem:[#allocation9 + $0xc] sm:$0xf]
      %v157 = vld [vmem:[%s4] sm:$0x1]
      %v159 = vlaneseq
      %v160 = vshrl.u32 %v159, 7
      %v161 = vsub.s32 0, %v160
      %v162 = vrot.slane %v157, %v161
      %v168 = vunpack.c.l.b16 %v153
      %v169 = vunpack.c.l.b16 %v154
      %v170 = vunpack.c.l.b16 %v155
      %v171 = vunpack.c.l.b16 %v156
      %v172 = vpack.c.b16 %v169, %v168
      %v173 = vpack.c.b16 %v171, %v170
      %v177 = vsel %vm93, %v152, 0
      %179 = vmatprep.subr.bf16.mxu0 0
      %180 = vmatpush1.bf16.msra.mxu0 %v172
      %181 = vmatprep.subr.bf16.mxu0 0
      %182 = vmatpush1.bf16.msra.mxu0 %v173
      %183 = vmatprep.subr.bf16.mxu0 0
      %184 = vmatpush1.bf16.msra.mxu0 0
      %185 = vmatprep.subr.bf16.mxu0 0
      %186 = vmatpush1.bf16.msra.mxu0 0
      %187 = vmatprep.subr.bf16.mxu0 0
      %188 = vmatpush1.bf16.msra.mxu0 0
      %189 = vmatprep.subr.bf16.mxu0 0
      %190 = vmatpush1.bf16.msra.mxu0 0
      %191 = vmatprep.subr.bf16.mxu0 0
      %192 = vmatpush1.bf16.msra.mxu0 0
      %193 = vmatprep.subr.bf16.mxu0 0
      %194 = vmatpush1.bf16.msra.mxu0 0
      %195 = vmatprep.subr.bf16.mxu0 0
      %196 = vmatpush1.bf16.msra.mxu0 0
      %197 = vmatprep.subr.bf16.mxu0 0
      %198 = vmatpush1.bf16.msra.mxu0 0
      %199 = vmatprep.subr.bf16.mxu0 0
      %200 = vmatpush1.bf16.msra.mxu0 0
      %201 = vmatprep.subr.bf16.mxu0 0
      %202 = vmatpush1.bf16.msra.mxu0 0
      %203 = vmatprep.subr.bf16.mxu0 0
      %204 = vmatpush1.bf16.msra.mxu0 0
      %205 = vmatprep.subr.bf16.mxu0 0
      %206 = vmatpush1.bf16.msra.mxu0 0
      %207 = vmatprep.subr.bf16.mxu0 0
      %208 = vmatpush1.bf16.msra.mxu0 0
      %209 = vmatprep.subr.bf16.mxu0 0
      %210 = vmatpush1.bf16.msra.mxu0 0
      %211 = vmatprep.mubr.bf16.mxu0 0
      %212 = vmatmul.mubr.bf16.gmra.mrb[0].mxu0 %v177
      %v213 = vpop.f32.mrb[0].mxu0
      %v214 = vadd.f32 %v162, %v213
      %v215 = vpop.f32.mrb[0].mxu0
      %v216 = vpop.f32.mrb[0].mxu0
      %v217 = vpop.f32.mrb[0].mxu0
      %218 = vdwg.mxu0
      %v219 = vmax.f32 %v214, 0.0
      %v220 = vld [vmem:[%s5] sm:$0x1]
      %v221 = vunpack.c.l.bf16 %v220
      %v222 = vlaneseq
      %v223 = vshrl.u32 %v222, 7
      %v224 = vsub.s32 0, %v223
      %v225 = vrot.slane %v221, %v224
      %v226 = vmul.f32 %v219, %v225
      %v227 = vsel %vm93, %v226, 0.0
      %228 = vadd.xlane.f32.xlu0 %v227
      %v229 = vpop.xlane.xlu0 %228
      %s230 = sld [smem:[#allocation3]]
      %v231 = vstv %s230
      %v232 = vadd.f32 %v229, %v231
      %233 = vxpose.xlu0.b32.start [1/16] %v232, 128
      %234 = vxpose.xlu0.b32.cont [2/16] 0.0, 128
      %235 = vxpose.xlu0.b32.cont [3/16] 0.0, 128
      %236 = vxpose.xlu0.b32.cont [4/16] 0.0, 128
      %237 = vxpose.xlu0.b32.cont [5/16] 0.0, 128
      %238 = vxpose.xlu0.b32.cont [6/16] 0.0, 128
      %239 = vxpose.xlu0.b32.cont [7/16] 0.0, 128
      %240 = vxpose.xlu0.b32.cont [8/16] 0.0, 128
      %241 = vxpose.xlu0.b32.cont [9/16] 0.0, 128
      %242 = vxpose.xlu0.b32.cont [10/16] 0.0, 128
      %243 = vxpose.xlu0.b32.cont [11/16] 0.0, 128
      %244 = vxpose.xlu0.b32.cont [12/16] 0.0, 128
      %245 = vxpose.xlu0.b32.cont [13/16] 0.0, 128
      %246 = vxpose.xlu0.b32.cont [14/16] 0.0, 128
      %247 = vxpose.xlu0.b32.cont [15/16] 0.0, 128
      %248 = vxpose.xlu0.b32.end [16/16] 0.0, 128
      %v249 = vpop.trf.xlu0
      %v250 = vpop.trf.xlu0
      %v251 = vpop.trf.xlu0
      %v252 = vpop.trf.xlu0
      %v253 = vpop.trf.xlu0
      %v254 = vpop.trf.xlu0
      %v255 = vpop.trf.xlu0
      %v256 = vpop.trf.xlu0
      %v257 = vpop.trf.xlu0
      %v258 = vpop.trf.xlu0
      %v259 = vpop.trf.xlu0
      %v260 = vpop.trf.xlu0
      %v261 = vpop.trf.xlu0
      %v262 = vpop.trf.xlu0
      %v263 = vpop.trf.xlu0
      %v264 = vpop.trf.xlu0
      %v265 = vxor.u32 %v249, 2147483648
      %v266 = vmul.f32 %v265, 1.442695
      %v267 = vpow.pop %v266
      %v268 = vadd.f32 %v267, 1.0
      %v269 = vrcp.pop %v268
      %v270 = vmul.f32 1.0, %v269
      %vm271 = vcmask 57344
      %272 = vst.msk [vmem:[#allocation10] sm:$0x1] %vm271, %v270
    $region49: #{tpu_custom_call.1} parent=1 // pred_fallthru
      _
    // Predicated region
    $region50: #{tpu_custom_call.1} parent=1 // pred_check
      _
    $region51: #{tpu_custom_call.1} parent=1 // pred_check_branch
      %274 = sbr.rel (0) target = $region53
    $region52: #{tpu_custom_call.1} parent=1 // pred_region
      %s276 = ssub.s32 16, 16
      %277 = vsyncadd [#allocation6], %s276
      %s279 = sshll.u32 [#allocation10], 4
      %s280 = int_to_ptr.vmem [resolvable:$true] %s279
      %282 = dma.vmem_to_hbm [thread:$0]  %s280, 16, %s7, [#allocation6]
    $region53: #{tpu_custom_call.1} parent=1 // pred_fallthru
      _
    // Predicated region
    $region54: #{tpu_custom_call.1} parent=1 // pred_check
      _
    $region55: #{tpu_custom_call.1} parent=1 // pred_check_branch
      %284 = sbr.rel (0) target = $region57
    $region56: #{tpu_custom_call.1} parent=1 // pred_region
      %285 = dma.done [#allocation6], 16
    $region57: #{tpu_custom_call.1} parent=1 // pred_fallthru
      _
    %286 = vsyncpa [#allocation5], 1
    %287 = vsyncpa [#allocation8], 1
    %288 = vsyncpa [#allocation6], 1

// kernel: tpu_custom_call.1
$region0: #{tpu_custom_call.1}
  #allocation0 [shape = 'u32[]', space=smem, size = 0x4, offset = 0x4, fixed_abs, tag = 'smem constant byte address 0x4 - core index']
  #allocation1 [shape = 'u32[144,128]{1,0:T(1,128)}', space=vmem, size = 0x12000, scoped, tag = 'internal scratch']
  #allocation2 [shape = 'f32[8,32]{1,0:T(8,128)}', space=vmem, size = 0x1000, scoped, tag = 'scratch operand']
  #allocation3 [shape = 'f32[1]{0:T(128)S(6)}', space=smem, size = 0x200, scoped, tag = 'scoped memory for tpu_custom_call.1']
  %s0 = inlined_call_operand.hbm [shape: f32[8,32], index: 0, kind: input, shape index: {}]
  %s1 = inlined_call_operand.hbm [shape: bf16[32,32], index: 1, kind: input, shape index: {}]
  %s2 = inlined_call_operand.vmem [shape: f32[1,32], index: 2, kind: input, shape index: {}]
  %s3 = inlined_call_operand.hbm [shape: bf16[32,32], index: 3, kind: input, shape index: {}]
  %s4 = inlined_call_operand.vmem [shape: f32[1,32], index: 4, kind: input, shape index: {}]
  %s5 = inlined_call_operand.vmem [shape: bf16[1,32], index: 5, kind: input, shape index: {}]
  %s6 = inlined_call_operand.<no memory space> [shape: f32[1], index: 6, kind: input, shape index: {}]
  %s7 = inlined_call_operand.hbm [shape: f32[1,8], index: 7, kind: output, shape index: {}]
  %s8 = sld [smem:[#allocation0]]
  $region58: #{tpu_custom_call.1} parent=0
    _
  %s10 = ssub.s32 1, %s8
  %s11 = scalar_select 0, %s10, %s8
  %12 = sst [smem:[#allocation3]] %s6
  $region1: #{tpu_custom_call.1} parent=0
    #allocation4 [shape = 'u8[4096]{0}', space=vmem, size = 0x1000, scoped, tag = 'input window, operand 0, single buffered']
    #allocation5 [shape = 's32[1]{0}', space=sflag, size = 0x4, scoped, tag = 'scoped memory for tpu_custom_call.1']
    #allocation6 [shape = 's32[1]{0}', space=sflag, size = 0x4, scoped, tag = 'scoped memory for tpu_custom_call.1']
    #allocation7 [shape = 'u8[8192]{0}', space=vmem, size = 0x2000, scoped, tag = 'input window, operand 1, single buffered']
    #allocation8 [shape = 's32[1]{0}', space=sflag, size = 0x4, scoped, tag = 'scoped memory for tpu_custom_call.1']
    #allocation9 [shape = 'u8[8192]{0}', space=vmem, size = 0x2000, scoped, tag = 'input window, operand 3, single buffered']
    #allocation10 [shape = 'u8[512]{0}', space=vmem, size = 0x400, scoped, tag = 'output window, operand 0, single buffered']
    %13 = vsyncpa [#allocation5], 0
    %14 = vsyncpa [#allocation8], 0
    %15 = vsyncpa [#allocation6], 0
    // Predicated region
    $region2: #{tpu_custom_call.1} parent=1 // pred_check
      _
    $region3: #{tpu_custom_call.1} parent=1 // pred_check_branch
      %17 = sbr.rel (0) target = $region5
    $region4: #{tpu_custom_call.1} parent=1 // pred_region
      %s19 = ssub.s32 128, 128
      %20 = vsyncadd [#allocation5], %s19
      %s22 = sshll.u32 [#allocation4], 4
      %s23 = int_to_ptr.vmem [resolvable:$true] %s22
      %25 = dma.hbm_to_vmem [thread:$0]  %s0, 128, %s23, [#allocation5]
    $region5: #{tpu_custom_call.1} parent=1 // pred_fallthru
      _
    // Predicated region
    $region6: #{tpu_custom_call.1} parent=1 // pred_check
      _
    $region7: #{tpu_custom_call.1} parent=1 // pred_check_branch
      %27 = sbr.rel (0) target = $region9
    $region8: #{tpu_custom_call.1} parent=1 // pred_region
      %s29 = ssub.s32 256, 256
      %30 = vsyncadd [#allocation8], %s29
      %s31 = sshll.u32 [#allocation7], 4
      %s32 = int_to_ptr.vmem [resolvable:$true] %s31
      %37 = dma.hbm_to_vmem [thread:$0]  %s1, 256, %s32, [#allocation8], 64, 64, 4
    $region9: #{tpu_custom_call.1} parent=1 // pred_fallthru
      _
    // Predicated region
    $region10: #{tpu_custom_call.1} parent=1 // pred_check
      _
    $region11: #{tpu_custom_call.1} parent=1 // pred_check_branch
      %39 = sbr.rel (0) target = $region13
    $region12: #{tpu_custom_call.1} parent=1 // pred_region
      _
    $region13: #{tpu_custom_call.1} parent=1 // pred_fallthru
      _
    // Predicated region
    $region14: #{tpu_custom_call.1} parent=1 // pred_check
      _
    $region15: #{tpu_custom_call.1} parent=1 // pred_check_branch
      %41 = sbr.rel (0) target = $region17
    $region16: #{tpu_custom_call.1} parent=1 // pred_region
      %s43 = ssub.s32 256, 256
      %44 = vsyncadd [#allocation8], %s43
      %s45 = sshll.u32 [#allocation9], 4
      %s46 = int_to_ptr.vmem [resolvable:$true] %s45
      %51 = dma.hbm_to_vmem [thread:$0]  %s3, 256, %s46, [#allocation8], 64, 64, 4
    $region17: #{tpu_custom_call.1} parent=1 // pred_fallthru
      _
    // Predicated region
    $region18: #{tpu_custom_call.1} parent=1 // pred_check
      _
    $region19: #{tpu_custom_call.1} parent=1 // pred_check_branch
      %53 = sbr.rel (0) target = $region21
    $region20: #{tpu_custom_call.1} parent=1 // pred_region
      _
    $region21: #{tpu_custom_call.1} parent=1 // pred_fallthru
      _
    // Predicated region
    $region22: #{tpu_custom_call.1} parent=1 // pred_check
      _
    $region23: #{tpu_custom_call.1} parent=1 // pred_check_branch
      %55 = sbr.rel (0) target = $region25
    $region24: #{tpu_custom_call.1} parent=1 // pred_region
      _
    $region25: #{tpu_custom_call.1} parent=1 // pred_fallthru
      _
    // Predicated region
    $region26: #{tpu_custom_call.1} parent=1 // pred_check
      _
    $region27: #{tpu_custom_call.1} parent=1 // pred_check_branch
      %57 = sbr.rel (0) target = $region29
    $region28: #{tpu_custom_call.1} parent=1 // pred_region
      _
    $region29: #{tpu_custom_call.1} parent=1 // pred_fallthru
      _
    // Predicated region
    $region30: #{tpu_custom_call.1} parent=1 // pred_check
      _
    $region31: #{tpu_custom_call.1} parent=1 // pred_check_branch
      %59 = sbr.rel (0) target = $region33
    $region32: #{tpu_custom_call.1} parent=1 // pred_region
      %60 = dma.done [#allocation5], 128
    $region33: #{tpu_custom_call.1} parent=1 // pred_fallthru
      _
    // Predicated region
    $region34: #{tpu_custom_call.1} parent=1 // pred_check
      _
    $region35: #{tpu_custom_call.1} parent=1 // pred_check_branch
      %62 = sbr.rel (0) target = $region37
    $region36: #{tpu_custom_call.1} parent=1 // pred_region
      %63 = dma.done [#allocation8], 256
    $region37: #{tpu_custom_call.1} parent=1 // pred_fallthru
      _
    // Predicated region
    $region38: #{tpu_custom_call.1} parent=1 // pred_check
      _
    $region39: #{tpu_custom_call.1} parent=1 // pred_check_branch
      %65 = sbr.rel (0) target = $region41
    $region40: #{tpu_custom_call.1} parent=1 // pred_region
      %66 = dma.done [#allocation8], 256
    $region41: #{tpu_custom_call.1} parent=1 // pred_fallthru
      _
    %p68 = scmp.eq.s32.totalorder 0, 0
    // Predicated region
    $region42: #{tpu_custom_call.1} parent=1 // pred_check
      %p69 = pneg %p68
    $region43: #{tpu_custom_call.1} parent=1 // pred_check_branch
      %71 = sbr.rel (%p69) target = $region45
    $region44: #{tpu_custom_call.1} parent=1 // pred_region
      %vm72 = vcmask 261120
      %73 = vst.msk [vmem:[#allocation2] sm:$0xff] %vm72, 0.0
    $region45: #{tpu_custom_call.1} parent=1 // pred_fallthru
      _
    %v74 = vld [vmem:[#allocation4] sm:$0xff]
    %v75 = vpack.c.bf16 %v74, %v74
    %v76 = vld [vmem:[#allocation2] sm:$0xff]
    %v77 = vld [vmem:[#allocation7] sm:$0xf]
    %v78 = vld [vmem:[#allocation7 + $0x4] sm:$0xf]
    %v79 = vld [vmem:[#allocation7 + $0x8] sm:$0xf]
    %v80 = vld [vmem:[#allocation7 + $0xc] sm:$0xf]
    %v85 = vunpack.c.l.b16 %v77
    %v86 = vunpack.c.l.b16 %v78
    %v87 = vunpack.c.l.b16 %v79
    %v88 = vunpack.c.l.b16 %v80
    %v89 = vpack.c.b16 %v86, %v85
    %v90 = vpack.c.b16 %v88, %v87
    %vm93 = vcmask 261120
    %v95 = vsel %vm93, %v75, 0
    %97 = vmatprep.subr.bf16.mxu0 0
    %98 = vmatpush1.bf16.msra.mxu0 %v89
    %99 = vmatprep.subr.bf16.mxu0 0
    %100 = vmatpush1.bf16.msra.mxu0 %v90
    %101 = vmatprep.subr.bf16.mxu0 0
    %102 = vmatpush1.bf16.msra.mxu0 0
    %103 = vmatprep.subr.bf16.mxu0 0
    %104 = vmatpush1.bf16.msra.mxu0 0
    %105 = vmatprep.subr.bf16.mxu0 0
    %106 = vmatpush1.bf16.msra.mxu0 0
    %107 = vmatprep.subr.bf16.mxu0 0
    %108 = vmatpush1.bf16.msra.mxu0 0
    %109 = vmatprep.subr.bf16.mxu0 0
    %110 = vmatpush1.bf16.msra.mxu0 0
    %111 = vmatprep.subr.bf16.mxu0 0
    %112 = vmatpush1.bf16.msra.mxu0 0
    %113 = vmatprep.subr.bf16.mxu0 0
    %114 = vmatpush1.bf16.msra.mxu0 0
    %115 = vmatprep.subr.bf16.mxu0 0
    %116 = vmatpush1.bf16.msra.mxu0 0
    %117 = vmatprep.subr.bf16.mxu0 0
    %118 = vmatpush1.bf16.msra.mxu0 0
    %119 = vmatprep.subr.bf16.mxu0 0
    %120 = vmatpush1.bf16.msra.mxu0 0
    %121 = vmatprep.subr.bf16.mxu0 0
    %122 = vmatpush1.bf16.msra.mxu0 0
    %123 = vmatprep.subr.bf16.mxu0 0
    %124 = vmatpush1.bf16.msra.mxu0 0
    %125 = vmatprep.subr.bf16.mxu0 0
    %126 = vmatpush1.bf16.msra.mxu0 0
    %127 = vmatprep.subr.bf16.mxu0 0
    %128 = vmatpush1.bf16.msra.mxu0 0
    %129 = vmatprep.mubr.bf16.mxu0 0
    %130 = vmatmul.mubr.bf16.gmra.mrb[0].mxu0 %v95
    %v131 = vpop.f32.mrb[0].mxu0
    %v132 = vadd.f32 0.0, %v131
    %v133 = vpop.f32.mrb[0].mxu0
    %v134 = vpop.f32.mrb[0].mxu0
    %v135 = vpop.f32.mrb[0].mxu0
    %136 = vdwg.mxu0
    %v137 = vadd.f32 %v76, %v132
    %138 = vst.msk [vmem:[#allocation2] sm:$0xff] %vm93, %v137
    // Predicated region
    $region46: #{tpu_custom_call.1} parent=1 // pred_check
      %p139 = pneg %p68
    $region47: #{tpu_custom_call.1} parent=1 // pred_check_branch
      %141 = sbr.rel (%p139) target = $region49
    $region48: #{tpu_custom_call.1} parent=1 // pred_region
      %v142 = vld [vmem:[#allocation2] sm:$0xff]
      %v143 = vld [vmem:[%s2] sm:$0x1]
      %v145 = vlaneseq
      %v146 = vshrl.u32 %v145, 7
      %v147 = vsub.s32 0, %v146
      %v148 = vrot.slane %v143, %v147
      %v150 = vadd.f32 %v142, %v148
      %v151 = vmax.f32 %v150, 0.0
      %v152 = vpack.c.bf16 %v151, %v151
      %v153 = vld [vmem:[#allocation9] sm:$0xf]
      %v154 = vld [vmem:[#allocation9 + $0x4] sm:$0xf]
      %v155 = vld [vmem:[#allocation9 + $0x8] sm:$0xf]
      %v156 = vld [vmem:[#allocation9 + $0xc] sm:$0xf]
      %v157 = vld [vmem:[%s4] sm:$0x1]
      %v159 = vlaneseq
      %v160 = vshrl.u32 %v159, 7
      %v161 = vsub.s32 0, %v160
      %v162 = vrot.slane %v157, %v161
      %v168 = vunpack.c.l.b16 %v153
      %v169 = vunpack.c.l.b16 %v154
      %v170 = vunpack.c.l.b16 %v155
      %v171 = vunpack.c.l.b16 %v156
      %v172 = vpack.c.b16 %v169, %v168
      %v173 = vpack.c.b16 %v171, %v170
      %v177 = vsel %vm93, %v152, 0
      %179 = vmatprep.subr.bf16.mxu0 0
      %180 = vmatpush1.bf16.msra.mxu0 %v172
      %181 = vmatprep.subr.bf16.mxu0 0
      %182 = vmatpush1.bf16.msra.mxu0 %v173
      %183 = vmatprep.subr.bf16.mxu0 0
      %184 = vmatpush1.bf16.msra.mxu0 0
      %185 = vmatprep.subr.bf16.mxu0 0
      %186 = vmatpush1.bf16.msra.mxu0 0
      %187 = vmatprep.subr.bf16.mxu0 0
      %188 = vmatpush1.bf16.msra.mxu0 0
      %189 = vmatprep.subr.bf16.mxu0 0
      %190 = vmatpush1.bf16.msra.mxu0 0
      %191 = vmatprep.subr.bf16.mxu0 0
      %192 = vmatpush1.bf16.msra.mxu0 0
      %193 = vmatprep.subr.bf16.mxu0 0
      %194 = vmatpush1.bf16.msra.mxu0 0
      %195 = vmatprep.subr.bf16.mxu0 0
      %196 = vmatpush1.bf16.msra.mxu0 0
      %197 = vmatprep.subr.bf16.mxu0 0
      %198 = vmatpush1.bf16.msra.mxu0 0
      %199 = vmatprep.subr.bf16.mxu0 0
      %200 = vmatpush1.bf16.msra.mxu0 0
      %201 = vmatprep.subr.bf16.mxu0 0
      %202 = vmatpush1.bf16.msra.mxu0 0
      %203 = vmatprep.subr.bf16.mxu0 0
      %204 = vmatpush1.bf16.msra.mxu0 0
      %205 = vmatprep.subr.bf16.mxu0 0
      %206 = vmatpush1.bf16.msra.mxu0 0
      %207 = vmatprep.subr.bf16.mxu0 0
      %208 = vmatpush1.bf16.msra.mxu0 0
      %209 = vmatprep.subr.bf16.mxu0 0
      %210 = vmatpush1.bf16.msra.mxu0 0
      %211 = vmatprep.mubr.bf16.mxu0 0
      %212 = vmatmul.mubr.bf16.gmra.mrb[0].mxu0 %v177
      %v213 = vpop.f32.mrb[0].mxu0
      %v214 = vadd.f32 %v162, %v213
      %v215 = vpop.f32.mrb[0].mxu0
      %v216 = vpop.f32.mrb[0].mxu0
      %v217 = vpop.f32.mrb[0].mxu0
      %218 = vdwg.mxu0
      %v219 = vmax.f32 %v214, 0.0
      %v220 = vld [vmem:[%s5] sm:$0x1]
      %v221 = vunpack.c.l.bf16 %v220
      %v222 = vlaneseq
      %v223 = vshrl.u32 %v222, 7
      %v224 = vsub.s32 0, %v223
      %v225 = vrot.slane %v221, %v224
      %v226 = vmul.f32 %v219, %v225
      %v227 = vsel %vm93, %v226, 0.0
      %228 = vadd.xlane.f32.xlu0 %v227
      %v229 = vpop.xlane.xlu0 %228
      %s230 = sld [smem:[#allocation3]]
      %v231 = vstv %s230
      %v232 = vadd.f32 %v229, %v231
      %233 = vxpose.xlu0.b32.start [1/16] %v232, 128
      %234 = vxpose.xlu0.b32.cont [2/16] 0.0, 128
      %235 = vxpose.xlu0.b32.cont [3/16] 0.0, 128
      %236 = vxpose.xlu0.b32.cont [4/16] 0.0, 128
      %237 = vxpose.xlu0.b32.cont [5/16] 0.0, 128
      %238 = vxpose.xlu0.b32.cont [6/16] 0.0, 128
      %239 = vxpose.xlu0.b32.cont [7/16] 0.0, 128
      %240 = vxpose.xlu0.b32.cont [8/16] 0.0, 128
      %241 = vxpose.xlu0.b32.cont [9/16] 0.0, 128
      %242 = vxpose.xlu0.b32.cont [10/16] 0.0, 128
      %243 = vxpose.xlu0.b32.cont [11/16] 0.0, 128
      %244 = vxpose.xlu0.b32.cont [12/16] 0.0, 128
      %245 = vxpose.xlu0.b32.cont [13/16] 0.0, 128
      %246 = vxpose.xlu0.b32.cont [14/16] 0.0, 128
      %247 = vxpose.xlu0.b32.cont [15/16] 0.0, 128
      %248 = vxpose.xlu0.b32.end [16/16] 0.0, 128
      %v249 = vpop.trf.xlu0
      %v250 = vpop.trf.xlu0
      %v251 = vpop.trf.xlu0
      %v252 = vpop.trf.xlu0
      %v253 = vpop.trf.xlu0
      %v254 = vpop.trf.xlu0
      %v255 = vpop.trf.xlu0
      %v256 = vpop.trf.xlu0
      %v257 = vpop.trf.xlu0
      %v258 = vpop.trf.xlu0
      %v259 = vpop.trf.xlu0
      %v260 = vpop.trf.xlu0
      %v261 = vpop.trf.xlu0
      %v262 = vpop.trf.xlu0
      %v263 = vpop.trf.xlu0
      %v264 = vpop.trf.xlu0
      %v265 = vxor.u32 %v249, 2147483648
      %v266 = vmul.f32 %v265, 1.442695
      %v267 = vpow.pop %v266
      %v268 = vadd.f32 %v267, 1.0
      %v269 = vrcp.pop %v268
      %v270 = vmul.f32 1.0, %v269
      %vm271 = vcmask 57344
      %272 = vst.msk [vmem:[#allocation10] sm:$0x1] %vm271, %v270
    $region49: #{tpu_custom_call.1} parent=1 // pred_fallthru
      _
    // Predicated region
    $region50: #{tpu_custom_call.1} parent=1 // pred_check
      _
    $region51: #{tpu_custom_call.1} parent=1 // pred_check_branch
      %274 = sbr.rel (0) target = $region53
    $region52: #{tpu_custom_call.1} parent=1 // pred_region
      %s276 = ssub.s32 16, 16
      %277 = vsyncadd [#allocation6], %s276
      %s279 = sshll.u32 [#allocation10], 4
      %s280 = int_to_ptr.vmem [resolvable:$true] %s279
      %282 = dma.vmem_to_hbm [thread:$0]  %s280, 16, %s7, [#allocation6]
    $region53: #{tpu_custom_call.1} parent=1 // pred_fallthru
      _
    // Predicated region
    $region54: #{tpu_custom_call.1} parent=1 // pred_check
      _
    $region55: #{tpu_custom_call.1} parent=1 // pred_check_branch
      %284 = sbr.rel (0) target = $region57
    $region56: #{tpu_custom_call.1} parent=1 // pred_region
      %285 = dma.done [#allocation6], 16
    $region57: #{tpu_custom_call.1} parent=1 // pred_fallthru
      _
    %286 = vsyncpa [#allocation5], 1
    %287 = vsyncpa [#allocation8], 1
    %288 = vsyncpa [#allocation6], 1

</llo_original>
